<compile_context>
chip_gen: v6e
topology: v6e:2x2x1
jax: 0.10.0
libtpu: 0.0.40
codegen_flags: <defaults>
</compile_context>

<pallas_src>
import functools
import math

import jax
import jax.numpy as jnp
from jax.experimental import pallas as pl
from jax.experimental.pallas import tpu as pltpu


def _round_up(x, m):
    return (x + m - 1) // m * m


def _choose_tile(dim, tile_max, align):
    """Round `dim` up to `align`, then split into the fewest tiles <= ~tile_max
    that are multiples of `align`. Returns (tile, padded_dim = tile * n_tiles)."""
    dim_aligned = _round_up(max(dim, 1), align)
    n_tiles = -(-dim_aligned // tile_max)              # cdiv
    tile = _round_up(-(-dim_aligned // n_tiles), align)
    return tile, tile * n_tiles


def _epilogue(acc_f32, b_ref, o_ref, *, scale, lr_mul, activate):
    # Fold the equalized-LR scale into the output. Valid for the leaky-relu
    # branch because scale = lr_mul / sqrt(K) > 0 (sign-preserving).
    out = acc_f32 * scale
    b = b_ref[...].astype(jnp.float32) * lr_mul        # (1, tn)
    if activate:
        # Literal translation of F.leaky_relu(out, bias * lr_mul):
        # per-output-channel negative slope, no bias addition.
        out = jnp.where(out >= 0, out, out * b)
    else:
        out = out + b
    o_ref[...] = out.astype(o_ref.dtype)


def _equal_linear_kernel_1k(x_ref, w_ref, b_ref, o_ref, *,
                            scale, lr_mul, activate):
    # Single K step: x_ref (tm, Kp), w_ref (Kp, tn), b_ref (1, tn), o_ref (tm, tn).
    acc = jnp.dot(x_ref[...], w_ref[...], preferred_element_type=jnp.float32)
    _epilogue(acc, b_ref, o_ref, scale=scale, lr_mul=lr_mul, activate=activate)


def _equal_linear_kernel_mk(x_ref, w_ref, b_ref, o_ref, acc_ref, *,
                            scale, lr_mul, activate):
    # Multi K step: x_ref (tm, tk), w_ref (tk, tn), acc_ref (tm, tn) f32 scratch.
    k = pl.program_id(2)
    part = jnp.dot(x_ref[...], w_ref[...], preferred_element_type=jnp.float32)

    @pl.when(k == 0)
    def _():
        acc_ref[...] = part

    @pl.when(k != 0)
    def _():
        acc_ref[...] += part

    @pl.when(k == pl.num_programs(2) - 1)
    def _():
        _epilogue(acc_ref[...], b_ref, o_ref,
                  scale=scale, lr_mul=lr_mul, activate=activate)


def equal_linear(x, weight, bias, *, lr_mul=1.0, activate=False,
                 tm=512, tn=256, tk=1024):
    """x: (M, K), weight: (N, K) [PyTorch nn.Linear layout], bias: (N,).

    Returns (M, N): the EqualLinear forward pass on the MXU.
    """
    M, K = x.shape
    N, K2 = weight.shape
    assert K == K2
    scale = (1.0 / math.sqrt(K)) * lr_mul

    # Tile selection: align dims to (8, 128) first, then split with minimal pad.
    tm, Mp = _choose_tile(M, tm, 8)
    tn, Np = _choose_tile(N, tn, 128)
    tk, Kp = _choose_tile(K, tk, 128)

    # One-time transpose to (K, N): kernel contracts ((1,),(0,)) with no
    # per-tile RHS transpose.  (Pre-transpose/pad at param setup in a model.)
    wt = weight.T

    xp = x if (Mp, Kp) == (M, K) else jnp.pad(x, ((0, Mp - M), (0, Kp - K)))
    wp = wt if (Kp, Np) == (K, N) else jnp.pad(wt, ((0, Kp - K), (0, Np - N)))
    bp = bias if Np == N else jnp.pad(bias, (0, Np - N))
    bp = bp.reshape(1, Np)

    n_k = Kp // tk
    itemsize = int(jnp.dtype(x.dtype).itemsize)
    out_itemsize = itemsize

    # Tile-derived VMEM budget: double-buffered x / w / out tiles (+ acc) + margin.
    vmem_needed = (2 * (tm * tk + tk * tn) * itemsize
                   + 2 * tm * tn * out_itemsize
                   + (tm * tn * 4 if n_k > 1 else 0)
                   + 2 * tn * 4)
    vmem_limit = min(_round_up(vmem_needed + (4 << 20), 1 << 20), 64 << 20)

    if n_k == 1:
        # Fast path: no accumulator scratch, no reduction grid axis.
        kernel = functools.partial(
            _equal_linear_kernel_1k, scale=scale, lr_mul=lr_mul, activate=activate)
        grid = (Mp // tm, Np // tn)
        out = pl.pallas_call(
            kernel,
            out_shape=jax.ShapeDtypeStruct((Mp, Np), x.dtype),
            grid_spec=pltpu.PrefetchScalarGridSpec(
                num_scalar_prefetch=0,
                grid=grid,
                in_specs=[
                    pl.BlockSpec((tm, Kp), lambda i, j: (i, 0)),   # x tile
                    pl.BlockSpec((Kp, tn), lambda i, j: (0, j)),   # weight.T tile
                    pl.BlockSpec((1, tn), lambda i, j: (0, j)),    # bias tile
                ],
                out_specs=pl.BlockSpec((tm, tn), lambda i, j: (i, j)),
            ),
            compiler_params=pltpu.CompilerParams(
                dimension_semantics=("parallel", "parallel"),
                vmem_limit_bytes=vmem_limit,
            ),
        )(xp, wp, bp)
    else:
        kernel = functools.partial(
            _equal_linear_kernel_mk, scale=scale, lr_mul=lr_mul, activate=activate)
        grid = (Mp // tm, Np // tn, n_k)
        out = pl.pallas_call(
            kernel,
            out_shape=jax.ShapeDtypeStruct((Mp, Np), x.dtype),
            grid_spec=pltpu.PrefetchScalarGridSpec(
                num_scalar_prefetch=0,
                grid=grid,
                in_specs=[
                    pl.BlockSpec((tm, tk), lambda i, j, k: (i, k)),  # x tile
                    pl.BlockSpec((tk, tn), lambda i, j, k: (k, j)),  # weight.T tile
                    pl.BlockSpec((1, tn), lambda i, j, k: (0, j)),   # bias tile
                ],
                out_specs=pl.BlockSpec((tm, tn), lambda i, j, k: (i, j)),
                scratch_shapes=[pltpu.VMEM((tm, tn), jnp.float32)],
            ),
            compiler_params=pltpu.CompilerParams(
                dimension_semantics=("parallel", "parallel", "arbitrary"),
                vmem_limit_bytes=vmem_limit,
            ),
        )(xp, wp, bp)

    if (Mp, Np) != (M, N):
        out = out[:M, :N]
    return out


def equal_linear_ref(x, weight, bias, *, lr_mul=1.0, activate=False):
    """Pure-JAX reference mirroring the PyTorch forward."""
    K = x.shape[-1]
    scale = (1.0 / math.sqrt(K)) * lr_mul
    out = x @ (weight * scale).T
    b = bias * lr_mul
    if activate:
        return jnp.where(out >= 0, out, out * b[None, :])
    return out + b[None, :]


if __name__ == "__main__":
    # Small deterministic setup consistent with the module's __init__.
    in_channel, out_channel = 32, 16
    batch = 8
    lr_mul = 0.5
    bias_init = 0.1

    key = jax.random.PRNGKey(0)
    kx, kw = jax.random.split(key)

    # weight = randn(out, in) / lr_mul ; bias = full(bias_init)
    weight = (jax.random.normal(kw, (out_channel, in_channel), jnp.float32)
              / lr_mul)
    bias = jnp.full((out_channel,), bias_init, jnp.float32)
    x = jax.random.normal(kx, (batch, in_channel), jnp.float32)

    # activate=False path (bias added inside kernel) -- single-K fast path.
    out_lin = equal_linear(x, weight, bias, lr_mul=lr_mul, activate=False)
    out_lin = jax.block_until_ready(out_lin)
    ref_lin = equal_linear_ref(x, weight, bias, lr_mul=lr_mul, activate=False)
    assert jnp.allclose(out_lin, ref_lin, atol=1e-5, rtol=1e-5)

    # activate=True path (per-channel leaky-relu slope = bias * lr_mul).
    out_act = equal_linear(x, weight, bias, lr_mul=lr_mul, activate=True)
    out_act = jax.block_until_ready(out_act)
    ref_act = equal_linear_ref(x, weight, bias, lr_mul=lr_mul, activate=True)
    assert jnp.allclose(out_act, ref_act, atol=1e-5, rtol=1e-5)

    # Ragged case with forced small tk to exercise padding + multi-K grid path.
    M2, K2, N2 = 200, 300, 192
    kx2, kw2 = jax.random.split(jax.random.PRNGKey(1))
    x2 = jax.random.normal(kx2, (M2, K2), jnp.float32)
    w2 = jax.random.normal(kw2, (N2, K2), jnp.float32) / lr_mul
    b2 = jnp.full((N2,), bias_init, jnp.float32)
    out2 = equal_linear(x2, w2, b2, lr_mul=lr_mul, activate=True,
                        tm=128, tn=128, tk=128)
    out2 = jax.block_until_ready(out2)
    ref2 = equal_linear_ref(x2, w2, b2, lr_mul=lr_mul, activate=True)
    assert jnp.allclose(out2, ref2, atol=1e-4, rtol=1e-4)

    # Ragged case on the single-K fast path with default tiles.
    out3 = equal_linear(x2, w2, b2, lr_mul=lr_mul, activate=False)
    out3 = jax.block_until_ready(out3)
    ref3 = equal_linear_ref(x2, w2, b2, lr_mul=lr_mul, activate=False)
    assert jnp.allclose(out3, ref3, atol=1e-4, rtol=1e-4)

    print("KERNEL_OK")
</pallas_src>

<mosaic_0001>
module attributes {stable_mosaic.version = 11 : i64} {
  func.func @_equal_linear_kernel_1k(%arg0: i32, %arg1: i32, %arg2: memref<8x128xf32, #tpu.memory_space<vmem>>, %arg3: memref<128x128xf32, #tpu.memory_space<vmem>>, %arg4: memref<1x128xf32, #tpu.memory_space<vmem>>, %arg5: memref<8x128xf32, #tpu.memory_space<vmem>>) attributes {dimension_semantics = [#tpu.dimension_semantics<parallel>, #tpu.dimension_semantics<parallel>], iteration_bounds = array<i64: 1, 1>, scalar_prefetch = 0 : i64, scratch_operands = 0 : i64, tpu.core_type = #tpu.core_type<tc>, window_params = [{transform_indices = @transform_0, window_bounds = array<i64: 8, 128>}, {transform_indices = @transform_1, window_bounds = array<i64: 128, 128>}, {transform_indices = @transform_2, window_bounds = array<i64: 1, 128>}, {transform_indices = @transform_3, window_bounds = array<i64: 8, 128>}]} {
    %c0 = arith.constant 0 : index
    %c0_0 = arith.constant 0 : index
    %0 = vector.load %arg2[%c0, %c0_0] : memref<8x128xf32, #tpu.memory_space<vmem>>, vector<8x128xf32>
    %c0_1 = arith.constant 0 : index
    %c0_2 = arith.constant 0 : index
    %1 = vector.load %arg3[%c0_1, %c0_2] : memref<128x128xf32, #tpu.memory_space<vmem>>, vector<128x128xf32>
    %cst = arith.constant dense<0.000000e+00> : vector<8x128xf32>
    %2 = tpu.matmul %0, %1, %cst {dimension_numbers = #tpu.dot_dimension_numbers<[1], [0], [0], [1], [0, 0, 1, 1], [], []>} : vector<8x128xf32>, vector<128x128xf32>, vector<8x128xf32> -> vector<8x128xf32>
    %cst_3 = arith.constant 0.0883883461 : f32
    %3 = vector.broadcast %cst_3 : f32 to vector<8x128xf32>
    %4 = arith.mulf %2, %3 : vector<8x128xf32>
    %c0_4 = arith.constant 0 : index
    %c0_5 = arith.constant 0 : index
    %5 = vector.load %arg4[%c0_4, %c0_5] : memref<1x128xf32, #tpu.memory_space<vmem>>, vector<1x128xf32>
    %cst_6 = arith.constant 5.000000e-01 : f32
    %6 = vector.broadcast %cst_6 : f32 to vector<1x128xf32>
    %7 = arith.mulf %5, %6 : vector<1x128xf32>
    %8 = vector.broadcast %7 : vector<1x128xf32> to vector<8x128xf32>
    %9 = arith.addf %4, %8 : vector<8x128xf32>
    %c0_7 = arith.constant 0 : index
    %c0_8 = arith.constant 0 : index
    %10 = vector.load %arg5[%c0_7, %c0_8] : memref<8x128xf32, #tpu.memory_space<vmem>>, vector<8x128xf32>
    tpu.vector_store %arg5[%c0_7, %c0_8], %9 {strides = array<i32>} : memref<8x128xf32, #tpu.memory_space<vmem>>, vector<8x128xf32>,
    return
  }
  func.func @transform_0(%arg0: i32, %arg1: i32) -> (i32, i32) {
    %c0_i32 = arith.constant 0 : i32
    %c0_i32_0 = arith.constant 0 : i32
    return %arg0, %c0_i32 : i32, i32
  }
  func.func @transform_1(%arg0: i32, %arg1: i32) -> (i32, i32) {
    %c0_i32 = arith.constant 0 : i32
    %c0_i32_0 = arith.constant 0 : i32
    return %c0_i32, %arg1 : i32, i32
  }
  func.func @transform_2(%arg0: i32, %arg1: i32) -> (i32, i32) {
    %c0_i32 = arith.constant 0 : i32
    %c0_i32_0 = arith.constant 0 : i32
    return %c0_i32, %arg1 : i32, i32
  }
  func.func @transform_3(%arg0: i32, %arg1: i32) -> (i32, i32) {
    %c0_i32 = arith.constant 0 : i32
    return %arg0, %arg1 : i32, i32
  }
}

</mosaic_0001>

<llo_original>
// kernel: tpu_custom_call.1
$region0: #{tpu_custom_call.1}
  #allocation0 [shape = 'u32[]', space=smem, size = 0x4, offset = 0x4, fixed_abs, tag = 'smem constant byte address 0x4 - core index']
  #allocation1 [shape = 'u32[144,128]{1,0:T(1,128)}', space=vmem, size = 0x12000, scoped, tag = 'internal scratch']
  %s0 = inlined_call_operand.hbm [shape: f32[8,128], index: 0, kind: input, shape index: {}]
  %s1 = inlined_call_operand.hbm [shape: f32[128,128], index: 1, kind: input, shape index: {}]
  %s2 = inlined_call_operand.vmem [shape: f32[1,128], index: 2, kind: input, shape index: {}]
  %s3 = inlined_call_operand.hbm [shape: f32[8,128], index: 3, kind: output, shape index: {}]
  %s4 = sld [smem:[#allocation0]]
  $region30: #{tpu_custom_call.1} parent=0
    _
  %s6 = ssub.s32 1, %s4
  %s7 = scalar_select 0, %s6, %s4
  $region1: #{tpu_custom_call.1} parent=0
    #allocation2 [shape = 'u8[4096]{0}', space=vmem, size = 0x1000, scoped, tag = 'input window, operand 0, single buffered']
    #allocation3 [shape = 's32[1]{0}', space=sflag, size = 0x4, scoped, tag = 'scoped memory for tpu_custom_call.1']
    #allocation4 [shape = 's32[1]{0}', space=sflag, size = 0x4, scoped, tag = 'scoped memory for tpu_custom_call.1']
    #allocation5 [shape = 'u8[65536]{0}', space=vmem, size = 0x10000, scoped, tag = 'input window, operand 1, single buffered']
    #allocation6 [shape = 's32[1]{0}', space=sflag, size = 0x4, scoped, tag = 'scoped memory for tpu_custom_call.1']
    #allocation7 [shape = 'u8[4096]{0}', space=vmem, size = 0x1000, scoped, tag = 'output window, operand 0, single buffered']
    %8 = vsyncpa [#allocation3], 0
    %9 = vsyncpa [#allocation6], 0
    %10 = vsyncpa [#allocation4], 0
    // Predicated region
    $region2: #{tpu_custom_call.1} parent=1 // pred_check
      _
    $region3: #{tpu_custom_call.1} parent=1 // pred_check_branch
      %12 = sbr.rel (0) target = $region5
    $region4: #{tpu_custom_call.1} parent=1 // pred_region
      %s14 = ssub.s32 128, 128
      %15 = vsyncadd [#allocation3], %s14
      %s17 = sshll.u32 [#allocation2], 4
      %s18 = int_to_ptr.vmem [resolvable:$true] %s17
      %20 = dma.hbm_to_vmem [thread:$0]  %s0, 128, %s18, [#allocation3]
    $region5: #{tpu_custom_call.1} parent=1 // pred_fallthru
      _
    // Predicated region
    $region6: #{tpu_custom_call.1} parent=1 // pred_check
      _
    $region7: #{tpu_custom_call.1} parent=1 // pred_check_branch
      %22 = sbr.rel (0) target = $region9
    $region8: #{tpu_custom_call.1} parent=1 // pred_region
      %s24 = ssub.s32 2048, 2048
      %25 = vsyncadd [#allocation6], %s24
      %s26 = sshll.u32 [#allocation5], 4
      %s27 = int_to_ptr.vmem [resolvable:$true] %s26
      %32 = dma.hbm_to_vmem [thread:$0]  %s1, 2048, %s27, [#allocation6], 128, 128, 8
    $region9: #{tpu_custom_call.1} parent=1 // pred_fallthru
      _
    // Predicated region
    $region10: #{tpu_custom_call.1} parent=1 // pred_check
      _
    $region11: #{tpu_custom_call.1} parent=1 // pred_check_branch
      %34 = sbr.rel (0) target = $region13
    $region12: #{tpu_custom_call.1} parent=1 // pred_region
      _
    $region13: #{tpu_custom_call.1} parent=1 // pred_fallthru
      _
    // Predicated region
    $region14: #{tpu_custom_call.1} parent=1 // pred_check
      _
    $region15: #{tpu_custom_call.1} parent=1 // pred_check_branch
      %36 = sbr.rel (0) target = $region17
    $region16: #{tpu_custom_call.1} parent=1 // pred_region
      %37 = dma.done [#allocation3], 128
    $region17: #{tpu_custom_call.1} parent=1 // pred_fallthru
      _
    // Predicated region
    $region18: #{tpu_custom_call.1} parent=1 // pred_check
      _
    $region19: #{tpu_custom_call.1} parent=1 // pred_check_branch
      %39 = sbr.rel (0) target = $region21
    $region20: #{tpu_custom_call.1} parent=1 // pred_region
      %40 = dma.done [#allocation6], 2048
    $region21: #{tpu_custom_call.1} parent=1 // pred_fallthru
      _
    %v41 = vld [vmem:[#allocation2] sm:$0xff]
    %v42 = vld [vmem:[#allocation5] sm:$0xff]
    %v43 = vld [vmem:[#allocation5 + $0x8] sm:$0xff]
    %v44 = vld [vmem:[#allocation5 + $0x10] sm:$0xff]
    %v45 = vld [vmem:[#allocation5 + $0x18] sm:$0xff]
    %v46 = vld [vmem:[#allocation5 + $0x20] sm:$0xff]
    %v47 = vld [vmem:[#allocation5 + $0x28] sm:$0xff]
    %v48 = vld [vmem:[#allocation5 + $0x30] sm:$0xff]
    %v49 = vld [vmem:[#allocation5 + $0x38] sm:$0xff]
    %v50 = vld [vmem:[#allocation5 + $0x40] sm:$0xff]
    %v51 = vld [vmem:[#allocation5 + $0x48] sm:$0xff]
    %v52 = vld [vmem:[#allocation5 + $0x50] sm:$0xff]
    %v53 = vld [vmem:[#allocation5 + $0x58] sm:$0xff]
    %v54 = vld [vmem:[#allocation5 + $0x60] sm:$0xff]
    %v55 = vld [vmem:[#allocation5 + $0x68] sm:$0xff]
    %v56 = vld [vmem:[#allocation5 + $0x70] sm:$0xff]
    %v57 = vld [vmem:[#allocation5 + $0x78] sm:$0xff]
    %58 = vmatprep.subr.mxu0 0.0
    %59 = vmatpush1.msra.mxu0 %v57
    %60 = vmatprep.subr.mxu0 0.0
    %61 = vmatpush1.msra.mxu0 %v56
    %62 = vmatprep.subr.mxu0 0.0
    %63 = vmatpush1.msra.mxu0 %v55
    %64 = vmatprep.subr.mxu0 0.0
    %65 = vmatpush1.msra.mxu0 %v54
    %66 = vmatprep.subr.mxu0 0.0
    %67 = vmatpush1.msra.mxu0 %v53
    %68 = vmatprep.subr.mxu0 0.0
    %69 = vmatpush1.msra.mxu0 %v52
    %70 = vmatprep.subr.mxu0 0.0
    %71 = vmatpush1.msra.mxu0 %v51
    %72 = vmatprep.subr.mxu0 0.0
    %73 = vmatpush1.msra.mxu0 %v50
    %74 = vmatprep.subr.mxu0 0.0
    %75 = vmatpush1.msra.mxu0 %v49
    %76 = vmatprep.subr.mxu0 0.0
    %77 = vmatpush1.msra.mxu0 %v48
    %78 = vmatprep.subr.mxu0 0.0
    %79 = vmatpush1.msra.mxu0 %v47
    %80 = vmatprep.subr.mxu0 0.0
    %81 = vmatpush1.msra.mxu0 %v46
    %82 = vmatprep.subr.mxu0 0.0
    %83 = vmatpush1.msra.mxu0 %v45
    %84 = vmatprep.subr.mxu0 0.0
    %85 = vmatpush1.msra.mxu0 %v44
    %86 = vmatprep.subr.mxu0 0.0
    %87 = vmatpush1.msra.mxu0 %v43
    %88 = vmatprep.subr.mxu0 0.0
    %89 = vmatpush1.msra.mxu0 %v42
    %90 = vmatprep.subr.mxu0 0.0
    %91 = vmatpush2.msra.mxu0 0.0
    %92 = vmatprep.subr.mxu0 0.0
    %93 = vmatpush2.msra.mxu0 0.0
    %94 = vmatprep.subr.mxu0 0.0
    %95 = vmatpush2.msra.mxu0 0.0
    %96 = vmatprep.subr.mxu0 0.0
    %97 = vmatpush2.msra.mxu0 0.0
    %98 = vmatprep.subr.mxu0 0.0
    %99 = vmatpush2.msra.mxu0 0.0
    %100 = vmatprep.subr.mxu0 0.0
    %101 = vmatpush2.msra.mxu0 0.0
    %102 = vmatprep.subr.mxu0 0.0
    %103 = vmatpush2.msra.mxu0 0.0
    %104 = vmatprep.subr.mxu0 0.0
    %105 = vmatpush2.msra.mxu0 0.0
    %106 = vmatprep.subr.mxu0 0.0
    %107 = vmatpush2.msra.mxu0 0.0
    %108 = vmatprep.subr.mxu0 0.0
    %109 = vmatpush2.msra.mxu0 0.0
    %110 = vmatprep.subr.mxu0 0.0
    %111 = vmatpush2.msra.mxu0 0.0
    %112 = vmatprep.subr.mxu0 0.0
    %113 = vmatpush2.msra.mxu0 0.0
    %114 = vmatprep.subr.mxu0 0.0
    %115 = vmatpush2.msra.mxu0 0.0
    %116 = vmatprep.subr.mxu0 0.0
    %117 = vmatpush2.msra.mxu0 0.0
    %118 = vmatprep.subr.mxu0 0.0
    %119 = vmatpush2.msra.mxu0 0.0
    %120 = vmatprep.subr.mxu0 0.0
    %121 = vmatpush2.msra.mxu0 0.0
    %122 = vmatprep.mubr.f32.mxu0 0.0
    %123 = vmatmul.mubr.f32.gmra.mxu0 %v41
    %v124 = vpop.f32.mrf.mxu0
    %v125 = vadd.f32 0.0, %v124
    %v126 = vpop.f32.mrf.mxu0
    %127 = vdwg.mxu0
    %v128 = vmul.f32 %v125, 0.088388346
    %v129 = vld [vmem:[%s2] sm:$0x1]
    %v130 = vmul.f32 %v129, 0.5
    %v132 = vlaneseq
    %v133 = vshrl.u32 %v132, 7
    %v134 = vsub.s32 0, %v133
    %v135 = vrot.slane %v130, %v134
    %v137 = vadd.f32 %v128, %v135
    %138 = vst [vmem:[#allocation7] sm:$0xff] %v137
    // Predicated region
    $region22: #{tpu_custom_call.1} parent=1 // pred_check
      _
    $region23: #{tpu_custom_call.1} parent=1 // pred_check_branch
      %140 = sbr.rel (0) target = $region25
    $region24: #{tpu_custom_call.1} parent=1 // pred_region
      %s142 = ssub.s32 128, 128
      %143 = vsyncadd [#allocation4], %s142
      %s145 = sshll.u32 [#allocation7], 4
      %s146 = int_to_ptr.vmem [resolvable:$true] %s145
      %148 = dma.vmem_to_hbm [thread:$0]  %s146, 128, %s3, [#allocation4]
    $region25: #{tpu_custom_call.1} parent=1 // pred_fallthru
      _
    // Predicated region
    $region26: #{tpu_custom_call.1} parent=1 // pred_check
      _
    $region27: #{tpu_custom_call.1} parent=1 // pred_check_branch
      %150 = sbr.rel (0) target = $region29
    $region28: #{tpu_custom_call.1} parent=1 // pred_region
      %151 = dma.done [#allocation4], 128
    $region29: #{tpu_custom_call.1} parent=1 // pred_fallthru
      _
    %152 = vsyncpa [#allocation3], 1
    %153 = vsyncpa [#allocation6], 1
    %154 = vsyncpa [#allocation4], 1

</llo_original>
